<compile_context>
chip_gen: v7x
topology: tpu7x:2x2x1
jax: 0.10.0
libtpu: 0.0.40
codegen_flags: <defaults>
</compile_context>

<pallas_src>
import jax
import jax.numpy as jnp
from jax.experimental import pallas as pl
from jax.experimental.pallas import tpu as pltpu


# Candidate lane widths (multiples of 128) for the lane-dense 2-D view.
_LANE_WIDTHS = (1024, 512, 256, 128)
# A handful of concurrent DMAs is enough to saturate the HBM copy engines.
_MAX_DMA_CHUNKS = 8


def _make_dma_copy_kernel(row_splits):
    """Build an HBM->HBM memcpy kernel over static, contiguous row chunks."""

    def kernel(x_hbm, o_hbm, sems):
        copies = []
        # Issue all chunk DMAs first (they overlap on the DMA engines) ...
        for k, (start, size) in enumerate(row_splits):
            cp = pltpu.make_async_copy(
                x_hbm.at[pl.ds(start, size), :],
                o_hbm.at[pl.ds(start, size), :],
                sems.at[k],
            )
            cp.start()
            copies.append(cp)
        # ... then wait on all of them.
        for cp in copies:
            cp.wait()

    return kernel


def _row_splits(m, itemsize):
    """Static, sublane-aligned row chunks for the DMA copy."""
    # Sublane tile of the HBM layout: 8 rows for 32-bit, 16 for bf16, 32 for
    # 8-bit types -> keeps every chunk boundary on a whole-tile boundary.
    sublane = max(8, 32 // max(1, itemsize))
    n_chunks = min(_MAX_DMA_CHUNKS, max(1, m // sublane))
    if n_chunks == 1:
        return ((0, m),)
    base = -(-m // n_chunks)                 # ceil(m / n_chunks)
    base = -(-base // sublane) * sublane     # round up to sublane multiple
    splits = []
    start = 0
    while start < m:
        size = min(base, m - start)
        splits.append((start, size))
        start += size
    return tuple(splits)


def pallas_squeeze(x: jax.Array) -> jax.Array:
    """Equivalent of torch.squeeze(x): drop every size-1 dimension."""
    in_shape = x.shape
    out_shape = tuple(d for d in in_shape if d != 1)

    if out_shape == in_shape:
        # No size-1 dims: squeeze is the identity -> return the input, zero cost.
        return x

    if len(out_shape) == 0 or x.size == 0:
        # 0-d result (all dims size 1) or empty tensor: metadata-only reshape.
        return jnp.reshape(x, out_shape)

    total = x.size
    itemsize = x.dtype.itemsize

    # Lane-dense factorization total = m * lane with lane a multiple of 128.
    lane = next((c for c in _LANE_WIDTHS if total % c == 0), None)
    if lane is None:
        # Irregular element count (not a multiple of 128): squeeze is still a
        # pure metadata reshape -- do it for free rather than building a
        # poorly laid-out (1, total) block.
        # TODO(synk): could split into a 128-aligned bulk DMA + tiny remainder
        # if a kernel copy were strictly mandated for this case.
        return jnp.reshape(x, out_shape)

    m = total // lane
    row_splits = _row_splits(m, itemsize)

    # Free metadata reshape to the lane-dense 2-D slab.
    x2d = jnp.reshape(x, (m, lane))

    y2d = pl.pallas_call(
        _make_dma_copy_kernel(row_splits),
        out_shape=jax.ShapeDtypeStruct((m, lane), x.dtype),
        # Both operands stay in HBM; the kernel only drives DMA engines.
        in_specs=[pl.BlockSpec(memory_space=pl.ANY)],
        out_specs=pl.BlockSpec(memory_space=pl.ANY),
        scratch_shapes=[pltpu.SemaphoreType.DMA((len(row_splits),))],
        cost_estimate=pl.CostEstimate(
            flops=0,
            transcendentals=0,
            bytes_accessed=2 * total * itemsize,
        ),
    )(x2d)

    # Free metadata reshape to the squeezed shape.
    return jnp.reshape(y2d, out_shape)


if __name__ == "__main__":
    key = jax.random.PRNGKey(0)

    # Typical squeeze use: (N, 1, C, H, W, 1) -> (N, C, H, W).
    x = jax.random.normal(key, (2, 1, 4, 16, 16, 1), dtype=jnp.float32)
    y = jax.block_until_ready(pallas_squeeze(x))
    assert y.shape == (2, 4, 16, 16), y.shape
    assert jnp.array_equal(y, jnp.squeeze(x)), "mismatch vs jnp.squeeze (f32)"

    # bf16 input exercising the multi-chunk DMA path: (8, 1, 32, 128) -> (8, 32, 128).
    xb = jax.random.normal(key, (8, 1, 32, 128), dtype=jnp.bfloat16)
    yb = jax.block_until_ready(pallas_squeeze(xb))
    assert yb.shape == (8, 32, 128), yb.shape
    assert jnp.array_equal(yb, jnp.squeeze(xb)), "mismatch vs jnp.squeeze (bf16)"

    # Irregular element count (not a multiple of 128): metadata reshape path.
    xi = jax.random.normal(key, (3, 1, 5), dtype=jnp.float32)
    yi = jax.block_until_ready(pallas_squeeze(xi))
    assert yi.shape == (3, 5), yi.shape
    assert jnp.array_equal(yi, jnp.squeeze(xi)), "mismatch vs jnp.squeeze (odd)"

    # No-op path: no size-1 dims -> input is returned untouched (no kernel).
    z = jax.random.normal(jax.random.PRNGKey(0), (2, 4, 16, 16), dtype=jnp.float32)
    z_out = jax.block_until_ready(pallas_squeeze(z))
    assert z_out.shape == (2, 4, 16, 16)
    assert jnp.array_equal(z_out, z)

    print("KERNEL_OK")
</pallas_src>

<mosaic_0001>
module attributes {stable_mosaic.version = 11 : i64} {
  func.func @kernel(%arg0: memref<2x1024xf32, #tpu.memory_space<any>>, %arg1: memref<2x1024xf32, #tpu.memory_space<any>>, %arg2: memref<1x!tpu.dma_semaphore, #tpu.memory_space<semaphore_mem>>) attributes {dimension_semantics = [], scalar_prefetch = 0 : i64, scratch_operands = 1 : i64, tpu.core_type = #tpu.core_type<tc>} {
    %c0_i32 = arith.constant 0 : i32
    %c0_i32_0 = arith.constant 0 : i32
    %c0_i32_1 = arith.constant 0 : i32
    %0 = tpu.memref_slice %arg0[%c0_i32_0, %c0_i32_1] : memref<2x1024xf32, #tpu.memory_space<any>> -> memref<2x1024xf32, #tpu.memory_space<any>>
    %c0_i32_2 = arith.constant 0 : i32
    %c0_i32_3 = arith.constant 0 : i32
    %1 = tpu.memref_slice %arg1[%c0_i32_2, %c0_i32_3] : memref<2x1024xf32, #tpu.memory_space<any>> -> memref<2x1024xf32, #tpu.memory_space<any>>
    %2 = tpu.memref_slice %arg2[%c0_i32] : memref<1x!tpu.dma_semaphore, #tpu.memory_space<semaphore_mem>> -> memref<1x!tpu.dma_semaphore, #tpu.memory_space<semaphore_mem>>
    %3 = tpu.memref_squeeze %2 : memref<1x!tpu.dma_semaphore, #tpu.memory_space<semaphore_mem>> -> memref<!tpu.dma_semaphore, #tpu.memory_space<semaphore_mem>>
    tpu.enqueue_dma source(%0 : memref<2x1024xf32, #tpu.memory_space<any>>) target(%1 : memref<2x1024xf32, #tpu.memory_space<any>>) target_semaphore(%3 : memref<!tpu.dma_semaphore, #tpu.memory_space<semaphore_mem>>)
    %c0_i32_4 = arith.constant 0 : i32
    %c0_i32_5 = arith.constant 0 : i32
    %c0_i32_6 = arith.constant 0 : i32
    %4 = tpu.memref_slice %arg0[%c0_i32_5, %c0_i32_6] : memref<2x1024xf32, #tpu.memory_space<any>> -> memref<2x1024xf32, #tpu.memory_space<any>>
    %c0_i32_7 = arith.constant 0 : i32
    %c0_i32_8 = arith.constant 0 : i32
    %5 = tpu.memref_slice %arg1[%c0_i32_7, %c0_i32_8] : memref<2x1024xf32, #tpu.memory_space<any>> -> memref<2x1024xf32, #tpu.memory_space<any>>
    %6 = tpu.memref_slice %arg2[%c0_i32_4] : memref<1x!tpu.dma_semaphore, #tpu.memory_space<semaphore_mem>> -> memref<1x!tpu.dma_semaphore, #tpu.memory_space<semaphore_mem>>
    %7 = tpu.memref_squeeze %6 : memref<1x!tpu.dma_semaphore, #tpu.memory_space<semaphore_mem>> -> memref<!tpu.dma_semaphore, #tpu.memory_space<semaphore_mem>>
    tpu.wait_dma2 semaphore(%7 : memref<!tpu.dma_semaphore, #tpu.memory_space<semaphore_mem>>) src(%4 : memref<2x1024xf32, #tpu.memory_space<any>>) dst(%5 : memref<2x1024xf32, #tpu.memory_space<any>>)
    return
  }
}

</mosaic_0001>

<llo_original>
// kernel: tpu_custom_call.1
$region0: #{tpu_custom_call.1}
  #allocation0 [shape = 'u32[]', space=smem, size = 0x4, offset = 0x4, fixed_abs, tag = 'smem constant byte address 0x4 - core index']
  #allocation1 [shape = 'u32[144,128]{1,0:T(1,128)}', space=vmem, size = 0x12000, scoped, tag = 'internal scratch']
  #allocation2 [shape = 's32[1]{0}', space=sflag, size = 0x4, scoped, tag = 'scratch operand']
  #allocation3 [shape = 's32[]', space=sflag, size = 0x4, offset = 0, fixed_abs, tag = 'sflag constant byte address 0x0 - dummy sync flag']
  #allocation4 [shape = 'u32[0]{0}', space=smem, size = 0, offset = 0, fixed_abs, tag = 'smem constant byte address 0x0 - null']
  %s0 = inlined_call_operand.hbm [shape: f32[2,1024], index: 0, kind: input, shape index: {}]
  %s1 = inlined_call_operand.hbm [shape: f32[2,1024], index: 1, kind: output, shape index: {}]
  %s2 = sld [smem:[#allocation0]]
  $region2: #{tpu_custom_call.1} parent=0
    _
  %s4 = ssub.s32 1, %s2
  %s5 = scalar_select 0, %s4, %s2
  %s7 = sshll.u32 1, 14
  %s8 = sxor.u32 4294967295, %s7
  %s11 = sshll.u32 3, 24
  %s12 = sxor.u32 4294967295, %s11
  %s13 = sand.u32 0, %s12
  %s15 = sor.u32 %s13, 0
  %18 = dma.general %s0, 256, %s1, [#allocation2], [#allocation3], [#allocation4], %s15, 0
  %s19 = smul.u32 2, 1
  %s20 = smul.u32 %s19, 8
  %s21 = sshll.u32 %s20, 4
  %22 = dma.done [#allocation2], %s21
  %23 = vsyncmov [#allocation2]
  %s24 = vpop.sfrf %23
  %p25 = scmp.eq.s32.totalorder %s24, 0
  %p26 = pneg %p25
  %28 = shalt.err (%p26)

</llo_original>
